<compile_context>
chip_gen: v5e
topology: v5e:2x2
jax: 0.10.0
libtpu: 0.0.40
codegen_flags: <defaults>
</compile_context>

<pallas_src>
import jax
import jax.numpy as jnp
from jax.experimental import pallas as pl
from jax.experimental.pallas import tpu as pltpu


LANE = 128


def _round_up(x, m):
    return (x + m - 1) // m * m


# ---------------------------------------------------------------------------
# Kernel
# ---------------------------------------------------------------------------
def _head_kernel(scal_ref, w1_ref, feat_ref, wht_ref, bh_ref, wot_ref, bo_ref,
                 logits_ref, att_ref):
    # SMEM scalars: [0] = a_fc1 bias, [1] = a_fc2 weight.
    # a_fc2 bias is intentionally dropped: softmax(x + c) == softmax(x).
    b1 = scal_ref[0]
    w2 = scal_ref[1]

    feats = feat_ref[...]                                  # (Bt, T, H), streaming dtype (bf16/f32)
    w1 = w1_ref[...].astype(feats.dtype)                   # (1, H) cheap cast, broadcasts over (Bt,T,H)

    # Attention scores, lane-dense over T: s[b, t] = <feats[b, t, :], w1> + b1.
    # Multiply in the streaming dtype (bf16 VPU-native on v6e/v7x), accumulate
    # the lane reduction and all softmax math in f32 (required on v5e).
    s = jnp.sum((feats * w1).astype(jnp.float32), axis=-1) + b1      # (Bt, T) f32
    u = jax.nn.sigmoid(s) * w2                              # a_fc1+sigmoid, then a_fc2 (bias dropped)

    # Softmax over the sequence axis (last axis -> lanes).
    m = jnp.max(u, axis=-1, keepdims=True)                  # (Bt, 1)
    e = jnp.exp(u - m)                                      # (Bt, T)
    denom = jnp.sum(e, axis=-1, keepdims=True)              # (Bt, 1)
    inv = pl.reciprocal(denom, approx=True)                 # EUP; frees the VPU divide chain
    alphas = e * inv                                        # (Bt, T)

    # Attention pooling as an MXU contraction over T: (Bt,1,T) @ (Bt,T,H) -> (Bt,1,H).
    pooled = jnp.einsum("bqt,bth->bqh",
                        alphas[:, None, :].astype(feats.dtype), feats,
                        preferred_element_type=jnp.float32)
    res_att = pooled[:, 0, :]                                # (Bt, H) f32

    # hidden_proj + ReLU (+ dropout as identity, eval mode) + out_proj.
    # bf16 operands on the MXU with f32 accumulation (native fast path).
    # TODO(synk): training-mode dropout not implemented; eval-mode identity used.
    cdt = wht_ref.dtype
    hidden = jnp.maximum(
        jnp.dot(res_att.astype(cdt), wht_ref[...],
                preferred_element_type=jnp.float32) + bh_ref[...],
        0.0)                                                 # (Bt, Pp) f32
    logits = (jnp.dot(hidden.astype(cdt), wot_ref[...],
                      preferred_element_type=jnp.float32) + bo_ref[...])   # (Bt, Lp) f32

    logits_ref[...] = logits.astype(logits_ref.dtype)
    att_ref[...] = res_att.astype(att_ref.dtype)


# ---------------------------------------------------------------------------
# One-time parameter prep (do this at model init; NOT per forward call)
# ---------------------------------------------------------------------------
def prepare_head_params(params, *, compute_dtype=jnp.bfloat16):
    """Transpose / zero-pad / cast the PyTorch-layout weights once.

    PyTorch Linear stores (out, in); we pre-transpose and zero-pad P and L up
    to 128-lane multiples so the MXU N dims and the output stores are
    lane-dense, and padding contributes exactly 0 to the logits.
    """
    f32 = jnp.float32
    H = params["a_fc1_w"].shape[-1]
    P = params["hidden_proj_w"].shape[0]
    L = params["out_proj_w"].shape[0]
    Pp = _round_up(P, LANE)
    Lp = _round_up(L, LANE)

    return {
        # a_fc1 bias and a_fc2 weight as SMEM scalars; a_fc2 bias dropped
        # (softmax shift invariance).
        "scalars": jnp.stack([params["a_fc1_b"].reshape(()),
                              params["a_fc2_w"].reshape(())]).astype(f32),      # (2,)
        "w1": params["a_fc1_w"].reshape(1, H).astype(compute_dtype),            # (1, H)
        "wht": jnp.pad(params["hidden_proj_w"].T.astype(f32),
                       ((0, 0), (0, Pp - P))).astype(compute_dtype),            # (H, Pp)
        "bh": jnp.pad(params["hidden_proj_b"].astype(f32),
                      (0, Pp - P)).reshape(1, Pp),                              # (1, Pp) f32
        "wot": jnp.pad(params["out_proj_w"].T.astype(f32),
                       ((0, Pp - P), (0, Lp - L))).astype(compute_dtype),       # (Pp, Lp)
        "bo": jnp.pad(params["out_proj_b"].astype(f32),
                      (0, Lp - L)).reshape(1, Lp),                              # (1, Lp) f32
        "dims": (H, P, L, Pp, Lp),
    }


# ---------------------------------------------------------------------------
# Tiling heuristics (generation-aware)
# ---------------------------------------------------------------------------
def _vmem_capacity_bytes():
    try:
        return int(pltpu.get_tpu_info().vmem_capacity_bytes)
    except Exception:
        return 64 * 1024 * 1024        # conservative default (v7x per-core)


def _choose_batch_tile(B, T, H, Pp, Lp, feat_itemsize, param_itemsize, budget):
    b_ceil = _round_up(max(B, 1), 8)
    # Guarantee >= 2 grid steps when B permits, so v7x's two TensorCores both
    # get work under dimension_semantics=("parallel",).
    if b_ceil >= 16:
        bt_cap = min(128, max(8, (b_ceil // 2) // 8 * 8))
    else:
        bt_cap = 8

    # Fixed (revisited) blocks are double-buffered by the pipeline: weights,
    # biases.  Outputs and the feature tile are also double-buffered.
    fixed = 2 * ((H + H * Pp + Pp * Lp) * param_itemsize + (Pp + Lp) * 4)

    def vmem_use(bt):
        feat = 2 * bt * T * H * feat_itemsize
        outs = 2 * bt * (Lp + H) * 4
        return fixed + feat + outs

    bt = 8
    while bt * 2 <= bt_cap and vmem_use(bt * 2) <= budget:
        bt *= 2
    return bt


# ---------------------------------------------------------------------------
# Forward wrapper
# ---------------------------------------------------------------------------
def wav2vec2_classification_head(features, prepared, *, batch_tile=None):
    """features: (B, T, H); prepared: output of prepare_head_params().

    Returns (logits (B, num_labels), attention (B, H)).
    """
    B, T, H = features.shape
    Hq, P, L, Pp, Lp = prepared["dims"]
    assert H == Hq, f"feature hidden dim {H} != prepared hidden dim {Hq}"

    feat_itemsize = features.dtype.itemsize
    param_itemsize = prepared["wht"].dtype.itemsize

    vmem_cap = _vmem_capacity_bytes()
    vmem_limit = min(int(vmem_cap * 0.85), 100 * 1024 * 1024)
    vmem_budget = int(vmem_limit * 0.75)

    if batch_tile is None:
        bt = _choose_batch_tile(B, T, H, Pp, Lp, feat_itemsize, param_itemsize,
                                vmem_budget)
    else:
        bt = min(_round_up(batch_tile, 8), _round_up(B, 8))

    # Hot path: no feature copy.  The trailing partial block uses Pallas
    # edge-block reads + masked output writes (all math is row-local).  Only
    # the degenerate B < bt (i.e. B < 8-row tile) case pads a few rows so the
    # block never exceeds a single sublane tile.
    feats = features
    B_run = B
    if B < bt:
        feats = jnp.pad(features, ((0, bt - B), (0, 0), (0, 0)))
        B_run = bt

    # Advisory cost estimate for XLA scheduling around this mem-bound call.
    flops = 2 * B * T * H            # score contraction
    flops += 2 * B * T * H           # attention pooling
    flops += 2 * B * H * Pp + 2 * B * Pp * Lp
    transcendentals = 2 * B * T      # sigmoid + exp
    bytes_accessed = (B * T * H * feat_itemsize
                      + (H + H * Pp + Pp * Lp) * param_itemsize
                      + (Pp + Lp) * 4
                      + B * (Lp + H) * 4)
    cost = pl.CostEstimate(flops=int(flops),
                           transcendentals=int(transcendentals),
                           bytes_accessed=int(bytes_accessed))

    logits_p, att_p = pl.pallas_call(
        _head_kernel,
        out_shape=(jax.ShapeDtypeStruct((B_run, Lp), jnp.float32),
                   jax.ShapeDtypeStruct((B_run, H), jnp.float32)),
        grid=(pl.cdiv(B_run, bt),),
        in_specs=[
            pl.BlockSpec(memory_space=pltpu.MemorySpace.SMEM),   # (b1, w2) scalars
            pl.BlockSpec((1, H), lambda b: (0, 0)),              # a_fc1 weight row
            pl.BlockSpec((bt, T, H), lambda b: (b, 0, 0)),       # feature tile
            pl.BlockSpec((H, Pp), lambda b: (0, 0)),             # hidden_proj W^T (padded)
            pl.BlockSpec((1, Pp), lambda b: (0, 0)),             # hidden_proj bias
            pl.BlockSpec((Pp, Lp), lambda b: (0, 0)),            # out_proj W^T (padded)
            pl.BlockSpec((1, Lp), lambda b: (0, 0)),             # out_proj bias
        ],
        out_specs=(
            pl.BlockSpec((bt, Lp), lambda b: (b, 0)),
            pl.BlockSpec((bt, H), lambda b: (b, 0)),
        ),
        compiler_params=pltpu.CompilerParams(
            dimension_semantics=("parallel",),                   # shards batch tiles across TCs
            vmem_limit_bytes=vmem_limit,
        ),
        cost_estimate=cost,
    )(prepared["scalars"], prepared["w1"], feats, prepared["wht"],
      prepared["bh"], prepared["wot"], prepared["bo"])

    return logits_p[:B, :L], att_p[:B, :]


# ---------------------------------------------------------------------------
# Pure-JAX reference + self-check
# ---------------------------------------------------------------------------
def _reference(features, params):
    """Pure-JAX reference mirroring the PyTorch forward (eval mode)."""
    f = features.astype(jnp.float32)
    v = jax.nn.sigmoid(jnp.einsum("bth,oh->bto", f, params["a_fc1_w"]) + params["a_fc1_b"])  # (B,T,1)
    u = (v * params["a_fc2_w"][0, 0] + params["a_fc2_b"][0])[..., 0]                          # (B,T)
    alphas = jax.nn.softmax(u, axis=1)
    res_att = jnp.einsum("bt,bth->bh", alphas, f)
    x = jax.nn.relu(res_att @ params["hidden_proj_w"].T + params["hidden_proj_b"])
    logits = x @ params["out_proj_w"].T + params["out_proj_b"]
    return logits, res_att


def _init_params(key, hidden_size, proj_size, num_labels):
    ks = jax.random.split(key, 8)

    def u(k, shape, fan_in):
        bound = 1.0 / jnp.sqrt(fan_in)
        return jax.random.uniform(k, shape, jnp.float32, -bound, bound)

    return {
        "a_fc1_w": u(ks[0], (1, hidden_size), hidden_size),
        "a_fc1_b": u(ks[1], (1,), hidden_size),
        "a_fc2_w": u(ks[2], (1, 1), 1),
        "a_fc2_b": u(ks[3], (1,), 1),
        "hidden_proj_w": u(ks[4], (proj_size, hidden_size), hidden_size),
        "hidden_proj_b": u(ks[5], (proj_size,), hidden_size),
        "out_proj_w": u(ks[6], (num_labels, proj_size), proj_size),
        "out_proj_b": u(ks[7], (num_labels,), proj_size),
    }


def _check(B, T, H, P, L, *, feat_dtype, compute_dtype, batch_tile=None,
           atol=2e-3, rtol=2e-3):
    key = jax.random.PRNGKey(0)
    k_feat, k_param = jax.random.split(key)
    features32 = jax.random.normal(k_feat, (B, T, H), jnp.float32)
    params = _init_params(k_param, H, P, L)

    prepared = prepare_head_params(params, compute_dtype=compute_dtype)  # once, at "init"
    feats_in = features32.astype(feat_dtype)

    logits, attention = wav2vec2_classification_head(feats_in, prepared,
                                                     batch_tile=batch_tile)
    logits, attention = jax.block_until_ready((logits, attention))

    # Reference on the same (possibly bf16-quantized) features, f32 weights.
    ref_logits, ref_att = _reference(feats_in.astype(jnp.float32), params)
    assert logits.shape == (B, L) and attention.shape == (B, H)
    # Tolerance accounts for the EUP approximate reciprocal in the softmax and,
    # in the bf16 case, bf16-quantized weights / alphas (swap approx=False and
    # compute_dtype=f32 for strict parity).
    assert jnp.allclose(logits, ref_logits, atol=atol, rtol=rtol), \
        float(jnp.max(jnp.abs(logits - ref_logits)))
    assert jnp.allclose(attention, ref_att, atol=atol, rtol=rtol), \
        float(jnp.max(jnp.abs(attention - ref_att)))


if __name__ == "__main__":
    # 1) f32 everything: tight check vs the pure-JAX reference (only the EUP
    #    approximate reciprocal perturbs results).  B=2 exercises the tiny-batch
    #    pad fallback (B < one 8-row tile).
    _check(2, 8, 32, 16, 4,
           feat_dtype=jnp.float32, compute_dtype=jnp.float32,
           atol=2e-3, rtol=2e-3)
    # 2) bf16 streaming path (default perf config): multi-step "parallel" grid
    #    with a partial trailing block and NO wrapper-side feature pad
    #    (B=20, bt=8 -> 3 grid steps, last one edge-masked).
    _check(20, 16, 32, 16, 4,
           feat_dtype=jnp.bfloat16, compute_dtype=jnp.bfloat16,
           batch_tile=8, atol=5e-2, rtol=5e-2)
    print("KERNEL_OK")
</pallas_src>

<mosaic_0001>
module attributes {stable_mosaic.version = 11 : i64} {
  func.func @_head_kernel(%arg0: i32, %arg1: memref<2xf32, #tpu.memory_space<smem>>, %arg2: memref<1x32xf32, #tpu.memory_space<vmem>>, %arg3: memref<8x8x32xf32, #tpu.memory_space<vmem>>, %arg4: memref<32x128xf32, #tpu.memory_space<vmem>>, %arg5: memref<1x128xf32, #tpu.memory_space<vmem>>, %arg6: memref<128x128xf32, #tpu.memory_space<vmem>>, %arg7: memref<1x128xf32, #tpu.memory_space<vmem>>, %arg8: memref<8x128xf32, #tpu.memory_space<vmem>>, %arg9: memref<8x32xf32, #tpu.memory_space<vmem>>) attributes {dimension_semantics = [#tpu.dimension_semantics<parallel>], iteration_bounds = array<i64: 1>, scalar_prefetch = 0 : i64, scratch_operands = 0 : i64, tpu.core_type = #tpu.core_type<tc>, window_params = [{transform_indices = @transform_0, window_bounds = array<i64: 2>}, {pipeline_mode = #tpu.pipeline_mode<synchronous>, transform_indices = @transform_1, window_bounds = array<i64: 1, 32>}, {transform_indices = @transform_2, window_bounds = array<i64: 8, 8, 32>}, {pipeline_mode = #tpu.pipeline_mode<synchronous>, transform_indices = @transform_3, window_bounds = array<i64: 32, 128>}, {pipeline_mode = #tpu.pipeline_mode<synchronous>, transform_indices = @transform_4, window_bounds = array<i64: 1, 128>}, {pipeline_mode = #tpu.pipeline_mode<synchronous>, transform_indices = @transform_5, window_bounds = array<i64: 128, 128>}, {pipeline_mode = #tpu.pipeline_mode<synchronous>, transform_indices = @transform_6, window_bounds = array<i64: 1, 128>}, {transform_indices = @transform_7, window_bounds = array<i64: 8, 128>}, {transform_indices = @transform_8, window_bounds = array<i64: 8, 32>}]} {
    %c0 = arith.constant 0 : index
    %0 = memref.load %arg1[%c0] : memref<2xf32, #tpu.memory_space<smem>>
    %c1 = arith.constant 1 : index
    %1 = memref.load %arg1[%c1] : memref<2xf32, #tpu.memory_space<smem>>
    %c0_0 = arith.constant 0 : index
    %c0_1 = arith.constant 0 : index
    %c0_2 = arith.constant 0 : index
    %2 = vector.load %arg3[%c0_0, %c0_1, %c0_2] : memref<8x8x32xf32, #tpu.memory_space<vmem>>, vector<8x8x32xf32>
    %c0_3 = arith.constant 0 : index
    %c0_4 = arith.constant 0 : index
    %3 = vector.load %arg2[%c0_3, %c0_4] : memref<1x32xf32, #tpu.memory_space<vmem>>, vector<1x32xf32>
    %4 = vector.shape_cast %3 : vector<1x32xf32> to vector<1x1x32xf32>
    %5 = vector.broadcast %4 : vector<1x1x32xf32> to vector<8x8x32xf32>
    %6 = arith.mulf %2, %5 : vector<8x8x32xf32>
    %cst = arith.constant dense<0.000000e+00> : vector<8x8xf32>
    %7 = vector.multi_reduction <add>, %6, %cst [2] : vector<8x8x32xf32> to vector<8x8xf32>
    %8 = vector.broadcast %0 : f32 to vector<8x8xf32>
    %9 = arith.addf %7, %8 : vector<8x8xf32>
    %10 = arith.negf %9 : vector<8x8xf32>
    %11 = math.exp %10 : vector<8x8xf32>
    %cst_5 = arith.constant 1.000000e+00 : f32
    %12 = vector.broadcast %cst_5 : f32 to vector<8x8xf32>
    %13 = arith.addf %12, %11 : vector<8x8xf32>
    %14 = arith.divf %12, %13 : vector<8x8xf32>
    %15 = vector.broadcast %1 : f32 to vector<8x8xf32>
    %16 = arith.mulf %14, %15 : vector<8x8xf32>
    %cst_6 = arith.constant dense<0xFF800000> : vector<8xf32>
    %17 = vector.multi_reduction <maximumf>, %16, %cst_6 [1] : vector<8x8xf32> to vector<8xf32>
    %18 = vector.shape_cast %17 : vector<8xf32> to vector<8x1xf32>
    %19 = vector.broadcast %18 : vector<8x1xf32> to vector<8x8xf32>
    %20 = arith.subf %16, %19 : vector<8x8xf32>
    %21 = math.exp %20 : vector<8x8xf32>
    %cst_7 = arith.constant dense<0.000000e+00> : vector<8xf32>
    %22 = vector.multi_reduction <add>, %21, %cst_7 [1] : vector<8x8xf32> to vector<8xf32>
    %23 = vector.shape_cast %22 : vector<8xf32> to vector<8x1xf32>
    %24 = tpu.reciprocal %23 {approx = true} : vector<8x1xf32> -> vector<8x1xf32>
    %25 = vector.broadcast %24 : vector<8x1xf32> to vector<8x8xf32>
    %26 = arith.mulf %21, %25 : vector<8x8xf32>
    %27 = vector.shape_cast %26 : vector<8x8xf32> to vector<8x1x8xf32>
    "tpu.trace_start"() <{level = 10 : i32, message = "bqt,bth->bqh"}> : () -> ()
    %cst_8 = arith.constant dense<0.000000e+00> : vector<8x1x32xf32>
    %28 = tpu.matmul %27, %2, %cst_8 {dimension_numbers = #tpu.dot_dimension_numbers<[2], [1], [1], [2], [0, 0, 0, 1, 1, 2], [0], [0]>} : vector<8x1x8xf32>, vector<8x8x32xf32>, vector<8x1x32xf32> -> vector<8x1x32xf32>
    "tpu.trace_stop"() : () -> ()
    %29 = vector.shape_cast %28 : vector<8x1x32xf32> to vector<8x32xf32>
    %c0_9 = arith.constant 0 : index
    %c0_10 = arith.constant 0 : index
    %30 = vector.load %arg4[%c0_9, %c0_10] : memref<32x128xf32, #tpu.memory_space<vmem>>, vector<32x128xf32>
    %cst_11 = arith.constant dense<0.000000e+00> : vector<8x128xf32>
    %31 = tpu.matmul %29, %30, %cst_11 {dimension_numbers = #tpu.dot_dimension_numbers<[1], [0], [0], [1], [0, 0, 1, 1], [], []>} : vector<8x32xf32>, vector<32x128xf32>, vector<8x128xf32> -> vector<8x128xf32>
    %c0_12 = arith.constant 0 : index
    %c0_13 = arith.constant 0 : index
    %32 = vector.load %arg5[%c0_12, %c0_13] : memref<1x128xf32, #tpu.memory_space<vmem>>, vector<1x128xf32>
    %33 = vector.broadcast %32 : vector<1x128xf32> to vector<8x128xf32>
    %34 = arith.addf %31, %33 : vector<8x128xf32>
    %cst_14 = arith.constant 0.000000e+00 : f32
    %35 = vector.broadcast %cst_14 : f32 to vector<8x128xf32>
    %36 = arith.maximumf %34, %35 : vector<8x128xf32>
    %c0_15 = arith.constant 0 : index
    %c0_16 = arith.constant 0 : index
    %37 = vector.load %arg6[%c0_15, %c0_16] : memref<128x128xf32, #tpu.memory_space<vmem>>, vector<128x128xf32>
    %cst_17 = arith.constant dense<0.000000e+00> : vector<8x128xf32>
    %38 = tpu.matmul %36, %37, %cst_17 {dimension_numbers = #tpu.dot_dimension_numbers<[1], [0], [0], [1], [0, 0, 1, 1], [], []>} : vector<8x128xf32>, vector<128x128xf32>, vector<8x128xf32> -> vector<8x128xf32>
    %c0_18 = arith.constant 0 : index
    %c0_19 = arith.constant 0 : index
    %39 = vector.load %arg7[%c0_18, %c0_19] : memref<1x128xf32, #tpu.memory_space<vmem>>, vector<1x128xf32>
    %40 = vector.broadcast %39 : vector<1x128xf32> to vector<8x128xf32>
    %41 = arith.addf %38, %40 : vector<8x128xf32>
    %c0_20 = arith.constant 0 : index
    %c0_21 = arith.constant 0 : index
    %42 = vector.load %arg8[%c0_20, %c0_21] : memref<8x128xf32, #tpu.memory_space<vmem>>, vector<8x128xf32>
    tpu.vector_store %arg8[%c0_20, %c0_21], %41 {strides = array<i32>} : memref<8x128xf32, #tpu.memory_space<vmem>>, vector<8x128xf32>,
    %c0_22 = arith.constant 0 : index
    %c0_23 = arith.constant 0 : index
    %43 = vector.load %arg9[%c0_22, %c0_23] : memref<8x32xf32, #tpu.memory_space<vmem>>, vector<8x32xf32>
    tpu.vector_store %arg9[%c0_22, %c0_23], %29 {strides = array<i32>} : memref<8x32xf32, #tpu.memory_space<vmem>>, vector<8x32xf32>,
    return
  }
  func.func @transform_0(%arg0: i32) -> i32 {
    %c0_i32 = arith.constant 0 : i32
    %c0_i32_0 = arith.constant 0 : i32
    return %c0_i32 : i32
  }
  func.func @transform_1(%arg0: i32) -> (i32, i32) {
    %c0_i32 = arith.constant 0 : i32
    %c0_i32_0 = arith.constant 0 : i32
    %c0_i32_1 = arith.constant 0 : i32
    return %c0_i32, %c0_i32_0 : i32, i32
  }
  func.func @transform_2(%arg0: i32) -> (i32, i32, i32) {
    %c0_i32 = arith.constant 0 : i32
    %c0_i32_0 = arith.constant 0 : i32
    %c0_i32_1 = arith.constant 0 : i32
    return %arg0, %c0_i32, %c0_i32_0 : i32, i32, i32
  }
  func.func @transform_3(%arg0: i32) -> (i32, i32) {
    %c0_i32 = arith.constant 0 : i32
    %c0_i32_0 = arith.constant 0 : i32
    %c0_i32_1 = arith.constant 0 : i32
    return %c0_i32, %c0_i32_0 : i32, i32
  }
  func.func @transform_4(%arg0: i32) -> (i32, i32) {
    %c0_i32 = arith.constant 0 : i32
    %c0_i32_0 = arith.constant 0 : i32
    %c0_i32_1 = arith.constant 0 : i32
    return %c0_i32, %c0_i32_0 : i32, i32
  }
  func.func @transform_5(%arg0: i32) -> (i32, i32) {
    %c0_i32 = arith.constant 0 : i32
    %c0_i32_0 = arith.constant 0 : i32
    %c0_i32_1 = arith.constant 0 : i32
    return %c0_i32, %c0_i32_0 : i32, i32
  }
  func.func @transform_6(%arg0: i32) -> (i32, i32) {
    %c0_i32 = arith.constant 0 : i32
    %c0_i32_0 = arith.constant 0 : i32
    %c0_i32_1 = arith.constant 0 : i32
    return %c0_i32, %c0_i32_0 : i32, i32
  }
  func.func @transform_7(%arg0: i32) -> (i32, i32) {
    %c0_i32 = arith.constant 0 : i32
    %c0_i32_0 = arith.constant 0 : i32
    return %arg0, %c0_i32 : i32, i32
  }
  func.func @transform_8(%arg0: i32) -> (i32, i32) {
    %c0_i32 = arith.constant 0 : i32
    %c0_i32_0 = arith.constant 0 : i32
    return %arg0, %c0_i32 : i32, i32
  }
}

</mosaic_0001>

<llo_original>
// kernel: tpu_custom_call.1
$region0: #{tpu_custom_call.1}
  #allocation0 [shape = 'u32[]', space=smem, size = 0x4, offset = 0x4, fixed_abs, tag = 'smem constant byte address 0x4 - core index']
  #allocation1 [shape = 'u32[72,128]{1,0:T(1,128)}', space=vmem, size = 0x9000, scoped, tag = 'internal scratch']
  %s0 = inlined_call_operand.hbm [shape: f32[2], index: 0, kind: input, shape index: {}]
  %s1 = inlined_call_operand.hbm [shape: f32[1,32], index: 1, kind: input, shape index: {}]
  %s2 = inlined_call_operand.hbm [shape: f32[8,8,32], index: 2, kind: input, shape index: {}]
  %s3 = inlined_call_operand.hbm [shape: f32[32,128], index: 3, kind: input, shape index: {}]
  %s4 = inlined_call_operand.vmem [shape: f32[1,128], index: 4, kind: input, shape index: {}]
  %s5 = inlined_call_operand.hbm [shape: f32[128,128], index: 5, kind: input, shape index: {}]
  %s6 = inlined_call_operand.vmem [shape: f32[1,128], index: 6, kind: input, shape index: {}]
  %s7 = inlined_call_operand.hbm [shape: f32[8,128], index: 7, kind: output, shape index: {0}]
  %s8 = inlined_call_operand.hbm [shape: f32[8,32], index: 8, kind: output, shape index: {1}]
  %9 = xla_tuple %s7, %s8
  %s10 = sld [smem:[#allocation0]]
  $region66: #{tpu_custom_call.1} parent=0
    _
  %s12 = ssub.s32 1, %s10
  %s13 = scalar_select 0, %s12, %s10
  $region1: #{tpu_custom_call.1} parent=0
    #allocation2 [shape = 'u8[512]{0}', space=smem, size = 0x200, scoped, tag = 'input window, operand 0, single buffered']
    #allocation3 [shape = 's32[1]{0}', space=sflag, size = 0x4, scoped, tag = 'scoped memory for tpu_custom_call.1']
    #allocation4 [shape = 's32[1]{0}', space=sflag, size = 0x4, scoped, tag = 'scoped memory for tpu_custom_call.1']
    #allocation5 [shape = 's32[1]{0}', space=sflag, size = 0x4, scoped, tag = 'scoped memory for tpu_custom_call.1']
    #allocation6 [shape = 'u8[512]{0}', space=vmem, size = 0x400, scoped, tag = 'input window, operand 1, single buffered']
    #allocation7 [shape = 'u8[32768]{0}', space=vmem, size = 0x8000, scoped, tag = 'input window, operand 2, single buffered']
    #allocation8 [shape = 's32[1]{0}', space=sflag, size = 0x4, scoped, tag = 'scoped memory for tpu_custom_call.1']
    #allocation9 [shape = 'u8[16384]{0}', space=vmem, size = 0x4000, scoped, tag = 'input window, operand 3, single buffered']
    #allocation10 [shape = 'u8[65536]{0}', space=vmem, size = 0x10000, scoped, tag = 'input window, operand 5, single buffered']
    #allocation11 [shape = 's32[1]{0}', space=sflag, size = 0x4, scoped, tag = 'scoped memory for tpu_custom_call.1']
    #allocation12 [shape = 'u8[4096]{0}', space=vmem, size = 0x1000, scoped, tag = 'output window, operand 0, single buffered']
    #allocation13 [shape = 'u8[4096]{0}', space=vmem, size = 0x1000, scoped, tag = 'output window, operand 1, single buffered']
    #allocation14 [shape = 's32[1]{0}', space=sflag, size = 0x4, scoped, tag = 'scoped memory for tpu_custom_call.1']
    %14 = vsyncpa [#allocation5], 0
    %15 = vsyncpa [#allocation3], 0
    %16 = vsyncpa [#allocation8], 0
    %17 = vsyncpa [#allocation11], 0
    %18 = vsyncpa [#allocation4], 0
    %19 = vsyncpa [#allocation14], 0
    // Predicated region
    $region2: #{tpu_custom_call.1} parent=1 // pred_check
      _
    $region3: #{tpu_custom_call.1} parent=1 // pred_check_branch
      %21 = sbr.rel (0) target = $region5
    $region4: #{tpu_custom_call.1} parent=1 // pred_region
      %23 = vsyncadd [#allocation5], 0
      %s25 = sshll.u32 %s0, 4
      %s26 = int_to_ptr.hbm [resolvable:$true] %s25
      %28 = dma.hbm_to_smem %s26, 16, [#allocation2], [#allocation5]
    $region5: #{tpu_custom_call.1} parent=1 // pred_fallthru
      _
    // Predicated region
    $region6: #{tpu_custom_call.1} parent=1 // pred_check
      _
    $region7: #{tpu_custom_call.1} parent=1 // pred_check_branch
      %30 = sbr.rel (0) target = $region9
    $region8: #{tpu_custom_call.1} parent=1 // pred_region
      %32 = vsyncadd [#allocation3], 0
      %s34 = sshll.u32 %s1, 4
      %s35 = int_to_ptr.hbm [resolvable:$true] %s34
      %s36 = sshll.u32 [#allocation6], 4
      %s37 = int_to_ptr.vmem [resolvable:$true] %s36
      %39 = dma.hbm_to_vmem [thread:$0]  %s35, 16, %s37, [#allocation3]
    $region9: #{tpu_custom_call.1} parent=1 // pred_fallthru
      _
    // Predicated region
    $region10: #{tpu_custom_call.1} parent=1 // pred_check
      _
    $region11: #{tpu_custom_call.1} parent=1 // pred_check_branch
      %41 = sbr.rel (0) target = $region13
    $region12: #{tpu_custom_call.1} parent=1 // pred_region
      %43 = vsyncadd [#allocation8], 0
      %s44 = sshll.u32 %s2, 4
      %s45 = int_to_ptr.hbm [resolvable:$true] %s44
      %s46 = sshll.u32 [#allocation7], 4
      %s47 = int_to_ptr.vmem [resolvable:$true] %s46
      %52 = dma.hbm_to_vmem [thread:$0]  %s45, 1024, %s47, [#allocation8], 128, 128, 8
    $region13: #{tpu_custom_call.1} parent=1 // pred_fallthru
      _
    // Predicated region
    $region14: #{tpu_custom_call.1} parent=1 // pred_check
      _
    $region15: #{tpu_custom_call.1} parent=1 // pred_check_branch
      %54 = sbr.rel (0) target = $region17
    $region16: #{tpu_custom_call.1} parent=1 // pred_region
      %56 = vsyncadd [#allocation8], 0
      %s57 = sshll.u32 %s3, 4
      %s58 = int_to_ptr.hbm [resolvable:$true] %s57
      %s59 = sshll.u32 [#allocation9], 4
      %s60 = int_to_ptr.vmem [resolvable:$true] %s59
      %65 = dma.hbm_to_vmem [thread:$0]  %s58, 512, %s60, [#allocation8], 128, 128, 8
    $region17: #{tpu_custom_call.1} parent=1 // pred_fallthru
      _
    // Predicated region
    $region18: #{tpu_custom_call.1} parent=1 // pred_check
      _
    $region19: #{tpu_custom_call.1} parent=1 // pred_check_branch
      %67 = sbr.rel (0) target = $region21
    $region20: #{tpu_custom_call.1} parent=1 // pred_region
      _
    $region21: #{tpu_custom_call.1} parent=1 // pred_fallthru
      _
    // Predicated region
    $region22: #{tpu_custom_call.1} parent=1 // pred_check
      _
    $region23: #{tpu_custom_call.1} parent=1 // pred_check_branch
      %69 = sbr.rel (0) target = $region25
    $region24: #{tpu_custom_call.1} parent=1 // pred_region
      %71 = vsyncadd [#allocation11], 0
      %s72 = sshll.u32 %s5, 4
      %s73 = int_to_ptr.hbm [resolvable:$true] %s72
      %s74 = sshll.u32 [#allocation10], 4
      %s75 = int_to_ptr.vmem [resolvable:$true] %s74
      %80 = dma.hbm_to_vmem [thread:$0]  %s73, 2048, %s75, [#allocation11], 128, 128, 8
    $region25: #{tpu_custom_call.1} parent=1 // pred_fallthru
      _
    // Predicated region
    $region26: #{tpu_custom_call.1} parent=1 // pred_check
      _
    $region27: #{tpu_custom_call.1} parent=1 // pred_check_branch
      %82 = sbr.rel (0) target = $region29
    $region28: #{tpu_custom_call.1} parent=1 // pred_region
      _
    $region29: #{tpu_custom_call.1} parent=1 // pred_fallthru
      _
    // Predicated region
    $region30: #{tpu_custom_call.1} parent=1 // pred_check
      _
    $region31: #{tpu_custom_call.1} parent=1 // pred_check_branch
      %84 = sbr.rel (0) target = $region33
    $region32: #{tpu_custom_call.1} parent=1 // pred_region
      %86 = dma.done [#allocation5], 16
    $region33: #{tpu_custom_call.1} parent=1 // pred_fallthru
      _
    // Predicated region
    $region34: #{tpu_custom_call.1} parent=1 // pred_check
      _
    $region35: #{tpu_custom_call.1} parent=1 // pred_check_branch
      %88 = sbr.rel (0) target = $region37
    $region36: #{tpu_custom_call.1} parent=1 // pred_region
      %90 = dma.done [#allocation3], 16
    $region37: #{tpu_custom_call.1} parent=1 // pred_fallthru
      _
    // Predicated region
    $region38: #{tpu_custom_call.1} parent=1 // pred_check
      _
    $region39: #{tpu_custom_call.1} parent=1 // pred_check_branch
      %92 = sbr.rel (0) target = $region41
    $region40: #{tpu_custom_call.1} parent=1 // pred_region
      %94 = dma.done [#allocation8], 1024
    $region41: #{tpu_custom_call.1} parent=1 // pred_fallthru
      _
    // Predicated region
    $region42: #{tpu_custom_call.1} parent=1 // pred_check
      _
    $region43: #{tpu_custom_call.1} parent=1 // pred_check_branch
      %96 = sbr.rel (0) target = $region45
    $region44: #{tpu_custom_call.1} parent=1 // pred_region
      %98 = dma.done [#allocation8], 512
    $region45: #{tpu_custom_call.1} parent=1 // pred_fallthru
      _
    // Predicated region
    $region46: #{tpu_custom_call.1} parent=1 // pred_check
      _
    $region47: #{tpu_custom_call.1} parent=1 // pred_check_branch
      %100 = sbr.rel (0) target = $region49
    $region48: #{tpu_custom_call.1} parent=1 // pred_region
      %102 = dma.done [#allocation11], 2048
    $region49: #{tpu_custom_call.1} parent=1 // pred_fallthru
      _
    %103 = sfence
    %s104 = sld [smem:[#allocation2]]
    %s105 = sld [smem:[#allocation2 + $0x1]]
    %v106 = vld [vmem:[#allocation7] sm:$0xff]
    %v107 = vld [vmem:[#allocation7 + $0x8] sm:$0xff]
    %v108 = vld [vmem:[#allocation7 + $0x10] sm:$0xff]
    %v109 = vld [vmem:[#allocation7 + $0x18] sm:$0xff]
    %v110 = vld [vmem:[#allocation7 + $0x20] sm:$0xff]
    %v111 = vld [vmem:[#allocation7 + $0x28] sm:$0xff]
    %v112 = vld [vmem:[#allocation7 + $0x30] sm:$0xff]
    %v113 = vld [vmem:[#allocation7 + $0x38] sm:$0xff]
    %v114 = vld [vmem:[#allocation6] sm:$0x1]
    %v116 = vperm.slane %v114, 0
    %v118 = vmul.f32 %v106, %v116
    %v119 = vmul.f32 %v107, %v116
    %v120 = vmul.f32 %v108, %v116
    %v121 = vmul.f32 %v109, %v116
    %v122 = vmul.f32 %v110, %v116
    %v123 = vmul.f32 %v111, %v116
    %v124 = vmul.f32 %v112, %v116
    %v125 = vmul.f32 %v113, %v116
    %vm126 = vcmask 261120
    %v127 = vsel %vm126, %v118, 0.0
    %128 = vadd.xlane.f32.xlu0 %v127
    %v129 = vpop.xlane.xlu0 %128
    %v130 = vsel %vm126, %v119, 0.0
    %131 = vadd.xlane.f32.xlu0 %v130
    %v132 = vpop.xlane.xlu0 %131
    %v133 = vsel %vm126, %v120, 0.0
    %134 = vadd.xlane.f32.xlu0 %v133
    %v135 = vpop.xlane.xlu0 %134
    %v136 = vsel %vm126, %v121, 0.0
    %137 = vadd.xlane.f32.xlu0 %v136
    %v138 = vpop.xlane.xlu0 %137
    %v139 = vsel %vm126, %v122, 0.0
    %140 = vadd.xlane.f32.xlu0 %v139
    %v141 = vpop.xlane.xlu0 %140
    %v142 = vsel %vm126, %v123, 0.0
    %143 = vadd.xlane.f32.xlu0 %v142
    %v144 = vpop.xlane.xlu0 %143
    %v145 = vsel %vm126, %v124, 0.0
    %146 = vadd.xlane.f32.xlu0 %v145
    %v147 = vpop.xlane.xlu0 %146
    %v148 = vsel %vm126, %v125, 0.0
    %149 = vadd.xlane.f32.xlu0 %v148
    %v150 = vpop.xlane.xlu0 %149
    %v151 = vstv %s104
    %v152 = vadd.f32 %v129, %v151
    %v153 = vadd.f32 %v132, %v151
    %v154 = vadd.f32 %v135, %v151
    %v155 = vadd.f32 %v138, %v151
    %v156 = vadd.f32 %v141, %v151
    %v157 = vadd.f32 %v144, %v151
    %v158 = vadd.f32 %v147, %v151
    %v159 = vadd.f32 %v150, %v151
    %v160 = vxor.u32 %v152, 2147483648
    %v161 = vxor.u32 %v153, 2147483648
    %v162 = vxor.u32 %v154, 2147483648
    %v163 = vxor.u32 %v155, 2147483648
    %v164 = vxor.u32 %v156, 2147483648
    %v165 = vxor.u32 %v157, 2147483648
    %v166 = vxor.u32 %v158, 2147483648
    %v167 = vxor.u32 %v159, 2147483648
    %v168 = vmul.f32 %v160, 1.442695
    %v169 = vpow.pop %v168
    %v170 = vmul.f32 %v161, 1.442695
    %v171 = vpow.pop %v170
    %v172 = vmul.f32 %v162, 1.442695
    %v173 = vpow.pop %v172
    %v174 = vmul.f32 %v163, 1.442695
    %v175 = vpow.pop %v174
    %v176 = vmul.f32 %v164, 1.442695
    %v177 = vpow.pop %v176
    %v178 = vmul.f32 %v165, 1.442695
    %v179 = vpow.pop %v178
    %v180 = vmul.f32 %v166, 1.442695
    %v181 = vpow.pop %v180
    %v182 = vmul.f32 %v167, 1.442695
    %v183 = vpow.pop %v182
    %v184 = vadd.f32 %v169, 1.0
    %v185 = vadd.f32 %v171, 1.0
    %v186 = vadd.f32 %v173, 1.0
    %v187 = vadd.f32 %v175, 1.0
    %v188 = vadd.f32 %v177, 1.0
    %v189 = vadd.f32 %v179, 1.0
    %v190 = vadd.f32 %v181, 1.0
    %v191 = vadd.f32 %v183, 1.0
    %v192 = vrcp.pop %v184
    %v193 = vmul.f32 %v184, %v192
    %v194 = vsub.f32 1.0, %v193
    %v195 = vmul.f32 %v192, %v194
    %v196 = vadd.f32 %v192, %v195
    %vm197 = vweird.f32 %v184
    %vm198 = vweird.f32 %v192
    %vm199 = vmor %vm197, %vm198
    %v200 = vsel %vm199, %v192, %v196
    %v201 = vand.u32 2147483647, %v184
    %vm202 = vcmp.eq.f32.partialorder %v201, 8.507059e+37
    %v203 = vand.u32 %v184, 2147483648
    %v204 = vor.u32 1.1754944e-38, %v203
    %v205 = vsel %vm202, %v204, %v200
    %v206 = vmul.f32 1.0, %v205
    %v207 = vrcp.pop %v185
    %v208 = vmul.f32 %v185, %v207
    %v209 = vsub.f32 1.0, %v208
    %v210 = vmul.f32 %v207, %v209
    %v211 = vadd.f32 %v207, %v210
    %vm212 = vweird.f32 %v185
    %vm213 = vweird.f32 %v207
    %vm214 = vmor %vm212, %vm213
    %v215 = vsel %vm214, %v207, %v211
    %v216 = vand.u32 2147483647, %v185
    %vm217 = vcmp.eq.f32.partialorder %v216, 8.507059e+37
    %v218 = vand.u32 %v185, 2147483648
    %v219 = vor.u32 1.1754944e-38, %v218
    %v220 = vsel %vm217, %v219, %v215
    %v221 = vmul.f32 1.0, %v220
    %v222 = vrcp.pop %v186
    %v223 = vmul.f32 %v186, %v222
    %v224 = vsub.f32 1.0, %v223
    %v225 = vmul.f32 %v222, %v224
    %v226 = vadd.f32 %v222, %v225
    %vm227 = vweird.f32 %v186
    %vm228 = vweird.f32 %v222
    %vm229 = vmor %vm227, %vm228
    %v230 = vsel %vm229, %v222, %v226
    %v231 = vand.u32 2147483647, %v186
    %vm232 = vcmp.eq.f32.partialorder %v231, 8.507059e+37
    %v233 = vand.u32 %v186, 2147483648
    %v234 = vor.u32 1.1754944e-38, %v233
    %v235 = vsel %vm232, %v234, %v230
    %v236 = vmul.f32 1.0, %v235
    %v237 = vrcp.pop %v187
    %v238 = vmul.f32 %v187, %v237
    %v239 = vsub.f32 1.0, %v238
    %v240 = vmul.f32 %v237, %v239
    %v241 = vadd.f32 %v237, %v240
    %vm242 = vweird.f32 %v187
    %vm243 = vweird.f32 %v237
    %vm244 = vmor %vm242, %vm243
    %v245 = vsel %vm244, %v237, %v241
    %v246 = vand.u32 2147483647, %v187
    %vm247 = vcmp.eq.f32.partialorder %v246, 8.507059e+37
    %v248 = vand.u32 %v187, 2147483648
    %v249 = vor.u32 1.1754944e-38, %v248
    %v250 = vsel %vm247, %v249, %v245
    %v251 = vmul.f32 1.0, %v250
    %v252 = vrcp.pop %v188
    %v253 = vmul.f32 %v188, %v252
    %v254 = vsub.f32 1.0, %v253
    %v255 = vmul.f32 %v252, %v254
    %v256 = vadd.f32 %v252, %v255
    %vm257 = vweird.f32 %v188
    %vm258 = vweird.f32 %v252
    %vm259 = vmor %vm257, %vm258
    %v260 = vsel %vm259, %v252, %v256
    %v261 = vand.u32 2147483647, %v188
    %vm262 = vcmp.eq.f32.partialorder %v261, 8.507059e+37
    %v263 = vand.u32 %v188, 2147483648
    %v264 = vor.u32 1.1754944e-38, %v263
    %v265 = vsel %vm262, %v264, %v260
    %v266 = vmul.f32 1.0, %v265
    %v267 = vrcp.pop %v189
    %v268 = vmul.f32 %v189, %v267
    %v269 = vsub.f32 1.0, %v268
    %v270 = vmul.f32 %v267, %v269
    %v271 = vadd.f32 %v267, %v270
    %vm272 = vweird.f32 %v189
    %vm273 = vweird.f32 %v267
    %vm274 = vmor %vm272, %vm273
    %v275 = vsel %vm274, %v267, %v271
    %v276 = vand.u32 2147483647, %v189
    %vm277 = vcmp.eq.f32.partialorder %v276, 8.507059e+37
    %v278 = vand.u32 %v189, 2147483648
    %v279 = vor.u32 1.1754944e-38, %v278
    %v280 = vsel %vm277, %v279, %v275
    %v281 = vmul.f32 1.0, %v280
    %v282 = vrcp.pop %v190
    %v283 = vmul.f32 %v190, %v282
    %v284 = vsub.f32 1.0, %v283
    %v285 = vmul.f32 %v282, %v284
    %v286 = vadd.f32 %v282, %v285
    %vm287 = vweird.f32 %v190
    %vm288 = vweird.f32 %v282
    %vm289 = vmor %vm287, %vm288
    %v290 = vsel %vm289, %v282, %v286
    %v291 = vand.u32 2147483647, %v190
    %vm292 = vcmp.eq.f32.partialorder %v291, 8.507059e+37
    %v293 = vand.u32 %v190, 2147483648
    %v294 = vor.u32 1.1754944e-38, %v293
    %v295 = vsel %vm292, %v294, %v290
    %v296 = vmul.f32 1.0, %v295
    %v297 = vrcp.pop %v191
    %v298 = vmul.f32 %v191, %v297
    %v299 = vsub.f32 1.0, %v298
    %v300 = vmul.f32 %v297, %v299
    %v301 = vadd.f32 %v297, %v300
    %vm302 = vweird.f32 %v191
    %vm303 = vweird.f32 %v297
    %vm304 = vmor %vm302, %vm303
    %v305 = vsel %vm304, %v297, %v301
    %v306 = vand.u32 2147483647, %v191
    %vm307 = vcmp.eq.f32.partialorder %v306, 8.507059e+37
    %v308 = vand.u32 %v191, 2147483648
    %v309 = vor.u32 1.1754944e-38, %v308
    %v310 = vsel %vm307, %v309, %v305
    %v311 = vmul.f32 1.0, %v310
    %v312 = vstv %s105
    %v313 = vmul.f32 %v206, %v312
    %v314 = vmul.f32 %v221, %v312
    %v315 = vmul.f32 %v236, %v312
    %v316 = vmul.f32 %v251, %v312
    %v317 = vmul.f32 %v266, %v312
    %v318 = vmul.f32 %v281, %v312
    %v319 = vmul.f32 %v296, %v312
    %v320 = vmul.f32 %v311, %v312
    %v329 = vlaneseq
    %v330 = vand.u32 %v329, 127
    %v331 = vperm.slane %v313, %v330
    %v332 = vperm.slane %v314, %v330
    %v333 = vperm.slane %v315, %v330
    %v334 = vperm.slane %v316, %v330
    %v335 = vperm.slane %v317, %v330
    %v336 = vperm.slane %v318, %v330
    %v337 = vperm.slane %v319, %v330
    %v338 = vperm.slane %v320, %v330
    %vm339 = vcmask 1041409
    %v340 = vsel %vm339, %v332, %v331
    %vm341 = vcmask 1042434
    %v342 = vsel %vm341, %v333, %v340
    %vm343 = vcmask 1043459
    %v344 = vsel %vm343, %v334, %v342
    %vm345 = vcmask 1044484
    %v346 = vsel %vm345, %v335, %v344
    %vm347 = vcmask 1045509
    %v348 = vsel %vm347, %v336, %v346
    %vm349 = vcmask 1046534
    %v350 = vsel %vm349, %v337, %v348
    %vm351 = vcmask 1047559
    %v352 = vsel %vm351, %v338, %v350
    %vm354 = vcmask 64512
    %v355 = vsel %vm354, %v352, -inf
    %356 = vmax.xlane.f32.xlu0 %v355
    %v357 = vpop.xlane.xlu0 %356
    %v359 = vperm.slane %v357, 0
    %v360 = vperm.slane %v357, 1
    %v361 = vperm.slane %v357, 2
    %v362 = vperm.slane %v357, 3
    %v363 = vperm.slane %v357, 4
    %v364 = vperm.slane %v357, 5
    %v365 = vperm.slane %v357, 6
    %v366 = vperm.slane %v357, 7
    %v375 = vsub.f32 %v313, %v359
    %v376 = vsub.f32 %v314, %v360
    %v377 = vsub.f32 %v315, %v361
    %v378 = vsub.f32 %v316, %v362
    %v379 = vsub.f32 %v317, %v363
    %v380 = vsub.f32 %v318, %v364
    %v381 = vsub.f32 %v319, %v365
    %v382 = vsub.f32 %v320, %v366
    %v383 = vmul.f32 %v375, 1.442695
    %v384 = vpow.pop %v383
    %v385 = vmul.f32 %v376, 1.442695
    %v386 = vpow.pop %v385
    %v387 = vmul.f32 %v377, 1.442695
    %v388 = vpow.pop %v387
    %v389 = vmul.f32 %v378, 1.442695
    %v390 = vpow.pop %v389
    %v391 = vmul.f32 %v379, 1.442695
    %v392 = vpow.pop %v391
    %v393 = vmul.f32 %v380, 1.442695
    %v394 = vpow.pop %v393
    %v395 = vmul.f32 %v381, 1.442695
    %v396 = vpow.pop %v395
    %v397 = vmul.f32 %v382, 1.442695
    %v398 = vpow.pop %v397
    %407 = vset.pattern.permute.xlu0 0
    %408 = vperm.xlu0 %407, %v384
    %v409 = vpop.permute.xlu0 %408
    %410 = vset.pattern.permute.xlu0 0
    %411 = vperm.xlu0 %410, %v386
    %v412 = vpop.permute.xlu0 %411
    %413 = vset.pattern.permute.xlu0 0
    %414 = vperm.xlu0 %413, %v388
    %v415 = vpop.permute.xlu0 %414
    %416 = vset.pattern.permute.xlu0 0
    %417 = vperm.xlu0 %416, %v390
    %v418 = vpop.permute.xlu0 %417
    %419 = vset.pattern.permute.xlu0 0
    %420 = vperm.xlu0 %419, %v392
    %v421 = vpop.permute.xlu0 %420
    %422 = vset.pattern.permute.xlu0 0
    %423 = vperm.xlu0 %422, %v394
    %v424 = vpop.permute.xlu0 %423
    %425 = vset.pattern.permute.xlu0 0
    %426 = vperm.xlu0 %425, %v396
    %v427 = vpop.permute.xlu0 %426
    %428 = vset.pattern.permute.xlu0 0
    %429 = vperm.xlu0 %428, %v398
    %v430 = vpop.permute.xlu0 %429
    %v431 = vperm.slane %v409, %v330
    %v432 = vperm.slane %v412, %v330
    %v433 = vperm.slane %v415, %v330
    %v434 = vperm.slane %v418, %v330
    %v435 = vperm.slane %v421, %v330
    %v436 = vperm.slane %v424, %v330
    %v437 = vperm.slane %v427, %v330
    %v438 = vperm.slane %v430, %v330
    %v439 = vsel %vm339, %v432, %v431
    %v440 = vsel %vm341, %v433, %v439
    %v441 = vsel %vm343, %v434, %v440
    %v442 = vsel %vm345, %v435, %v441
    %v443 = vsel %vm347, %v436, %v442
    %v444 = vsel %vm349, %v437, %v443
    %v445 = vsel %vm351, %v438, %v444
    %v447 = vsel %vm354, %v445, 0.0
    %448 = vadd.xlane.f32.xlu0 %v447
    %v449 = vpop.xlane.xlu0 %448
    %v450 = vrcp.pop %v449
    %v452 = vperm.slane %v450, 0
    %v453 = vperm.slane %v450, 1
    %v454 = vperm.slane %v450, 2
    %v455 = vperm.slane %v450, 3
    %v456 = vperm.slane %v450, 4
    %v457 = vperm.slane %v450, 5
    %v458 = vperm.slane %v450, 6
    %v459 = vperm.slane %v450, 7
    %v468 = vmul.f32 %v384, %v452
    %v469 = vmul.f32 %v386, %v453
    %v470 = vmul.f32 %v388, %v454
    %v471 = vmul.f32 %v390, %v455
    %v472 = vmul.f32 %v392, %v456
    %v473 = vmul.f32 %v394, %v457
    %v474 = vmul.f32 %v396, %v458
    %v475 = vmul.f32 %v398, %v459
    %477 = vset.pattern.permute.xlu0 0
    %478 = vperm.xlu0 %477, %v468
    %v479 = vpop.permute.xlu0 %478
    %v480 = vperm.slane %v479, %v330
    %v481 = vsel %vm354, %v480, 0
    %483 = vmatpush.msra.mxu0 0.0
    %484 = vmatpush.msra.mxu0 0.0
    %485 = vmatpush.msra.mxu0 0.0
    %486 = vmatpush.msra.mxu0 0.0
    %487 = vmatpush.msra.mxu0 0.0
    %488 = vmatpush.msra.mxu0 0.0
    %489 = vmatpush.msra.mxu0 0.0
    %490 = vmatpush.msra.mxu0 0.0
    %491 = vmatpush.msra.mxu0 0.0
    %492 = vmatpush.msra.mxu0 0.0
    %493 = vmatpush.msra.mxu0 0.0
    %494 = vmatpush.msra.mxu0 0.0
    %495 = vmatpush.msra.mxu0 0.0
    %496 = vmatpush.msra.mxu0 0.0
    %497 = vmatpush.msra.mxu0 0.0
    %498 = vmatpush.msra.mxu0 %v106
    %499 = vmatmul.f32.gmra.mxu0 %v481
    %v500 = vpop.f32.mrf.mxu0
    %v501 = vadd.f32 0.0, %v500
    %502 = vdwg.mxu0
    %504 = vset.pattern.permute.xlu0 0
    %505 = vperm.xlu0 %504, %v469
    %v506 = vpop.permute.xlu0 %505
    %v507 = vperm.slane %v506, %v330
    %v508 = vsel %vm354, %v507, 0
    %510 = vmatpush.msra.mxu0 0.0
    %511 = vmatpush.msra.mxu0 0.0
    %512 = vmatpush.msra.mxu0 0.0
    %513 = vmatpush.msra.mxu0 0.0
    %514 = vmatpush.msra.mxu0 0.0
    %515 = vmatpush.msra.mxu0 0.0
    %516 = vmatpush.msra.mxu0 0.0
    %517 = vmatpush.msra.mxu0 0.0
    %518 = vmatpush.msra.mxu0 0.0
    %519 = vmatpush.msra.mxu0 0.0
    %520 = vmatpush.msra.mxu0 0.0
    %521 = vmatpush.msra.mxu0 0.0
    %522 = vmatpush.msra.mxu0 0.0
    %523 = vmatpush.msra.mxu0 0.0
    %524 = vmatpush.msra.mxu0 0.0
    %525 = vmatpush.msra.mxu0 %v107
    %526 = vmatmul.f32.gmra.mxu0 %v508
    %v527 = vpop.f32.mrf.mxu0
    %v528 = vadd.f32 0.0, %v527
    %529 = vdwg.mxu0
    %531 = vset.pattern.permute.xlu0 0
    %532 = vperm.xlu0 %531, %v470
    %v533 = vpop.permute.xlu0 %532
    %v534 = vperm.slane %v533, %v330
    %v535 = vsel %vm354, %v534, 0
    %537 = vmatpush.msra.mxu0 0.0
    %538 = vmatpush.msra.mxu0 0.0
    %539 = vmatpush.msra.mxu0 0.0
    %540 = vmatpush.msra.mxu0 0.0
    %541 = vmatpush.msra.mxu0 0.0
    %542 = vmatpush.msra.mxu0 0.0
    %543 = vmatpush.msra.mxu0 0.0
    %544 = vmatpush.msra.mxu0 0.0
    %545 = vmatpush.msra.mxu0 0.0
    %546 = vmatpush.msra.mxu0 0.0
    %547 = vmatpush.msra.mxu0 0.0
    %548 = vmatpush.msra.mxu0 0.0
    %549 = vmatpush.msra.mxu0 0.0
    %550 = vmatpush.msra.mxu0 0.0
    %551 = vmatpush.msra.mxu0 0.0
    %552 = vmatpush.msra.mxu0 %v108
    %553 = vmatmul.f32.gmra.mxu0 %v535
    %v554 = vpop.f32.mrf.mxu0
    %v555 = vadd.f32 0.0, %v554
    %556 = vdwg.mxu0
    %558 = vset.pattern.permute.xlu0 0
    %559 = vperm.xlu0 %558, %v471
    %v560 = vpop.permute.xlu0 %559
    %v561 = vperm.slane %v560, %v330
    %v562 = vsel %vm354, %v561, 0
    %564 = vmatpush.msra.mxu0 0.0
    %565 = vmatpush.msra.mxu0 0.0
    %566 = vmatpush.msra.mxu0 0.0
    %567 = vmatpush.msra.mxu0 0.0
    %568 = vmatpush.msra.mxu0 0.0
    %569 = vmatpush.msra.mxu0 0.0
    %570 = vmatpush.msra.mxu0 0.0
    %571 = vmatpush.msra.mxu0 0.0
    %572 = vmatpush.msra.mxu0 0.0
    %573 = vmatpush.msra.mxu0 0.0
    %574 = vmatpush.msra.mxu0 0.0
    %575 = vmatpush.msra.mxu0 0.0
    %576 = vmatpush.msra.mxu0 0.0
    %577 = vmatpush.msra.mxu0 0.0
    %578 = vmatpush.msra.mxu0 0.0
    %579 = vmatpush.msra.mxu0 %v109
    %580 = vmatmul.f32.gmra.mxu0 %v562
    %v581 = vpop.f32.mrf.mxu0
    %v582 = vadd.f32 0.0, %v581
    %583 = vdwg.mxu0
    %585 = vset.pattern.permute.xlu0 0
    %586 = vperm.xlu0 %585, %v472
    %v587 = vpop.permute.xlu0 %586
    %v588 = vperm.slane %v587, %v330
    %v589 = vsel %vm354, %v588, 0
    %591 = vmatpush.msra.mxu0 0.0
    %592 = vmatpush.msra.mxu0 0.0
    %593 = vmatpush.msra.mxu0 0.0
    %594 = vmatpush.msra.mxu0 0.0
    %595 = vmatpush.msra.mxu0 0.0
    %596 = vmatpush.msra.mxu0 0.0
    %597 = vmatpush.msra.mxu0 0.0
    %598 = vmatpush.msra.mxu0 0.0
    %599 = vmatpush.msra.mxu0 0.0
    %600 = vmatpush.msra.mxu0 0.0
    %601 = vmatpush.msra.mxu0 0.0
    %602 = vmatpush.msra.mxu0 0.0
    %603 = vmatpush.msra.mxu0 0.0
    %604 = vmatpush.msra.mxu0 0.0
    %605 = vmatpush.msra.mxu0 0.0
    %606 = vmatpush.msra.mxu0 %v110
    %607 = vmatmul.f32.gmra.mxu0 %v589
    %v608 = vpop.f32.mrf.mxu0
    %v609 = vadd.f32 0.0, %v608
    %610 = vdwg.mxu0
    %612 = vset.pattern.permute.xlu0 0
    %613 = vperm.xlu0 %612, %v473
    %v614 = vpop.permute.xlu0 %613
    %v615 = vperm.slane %v614, %v330
    %v616 = vsel %vm354, %v615, 0
    %618 = vmatpush.msra.mxu0 0.0
    %619 = vmatpush.msra.mxu0 0.0
    %620 = vmatpush.msra.mxu0 0.0
    %621 = vmatpush.msra.mxu0 0.0
    %622 = vmatpush.msra.mxu0 0.0
    %623 = vmatpush.msra.mxu0 0.0
    %624 = vmatpush.msra.mxu0 0.0
    %625 = vmatpush.msra.mxu0 0.0
    %626 = vmatpush.msra.mxu0 0.0
    %627 = vmatpush.msra.mxu0 0.0
    %628 = vmatpush.msra.mxu0 0.0
    %629 = vmatpush.msra.mxu0 0.0
    %630 = vmatpush.msra.mxu0 0.0
    %631 = vmatpush.msra.mxu0 0.0
    %632 = vmatpush.msra.mxu0 0.0
    %633 = vmatpush.msra.mxu0 %v111
    %634 = vmatmul.f32.gmra.mxu0 %v616
    %v635 = vpop.f32.mrf.mxu0
    %v636 = vadd.f32 0.0, %v635
    %637 = vdwg.mxu0
    %639 = vset.pattern.permute.xlu0 0
    %640 = vperm.xlu0 %639, %v474
    %v641 = vpop.permute.xlu0 %640
    %v642 = vperm.slane %v641, %v330
    %v643 = vsel %vm354, %v642, 0
    %645 = vmatpush.msra.mxu0 0.0
    %646 = vmatpush.msra.mxu0 0.0
    %647 = vmatpush.msra.mxu0 0.0
    %648 = vmatpush.msra.mxu0 0.0
    %649 = vmatpush.msra.mxu0 0.0
    %650 = vmatpush.msra.mxu0 0.0
    %651 = vmatpush.msra.mxu0 0.0
    %652 = vmatpush.msra.mxu0 0.0
    %653 = vmatpush.msra.mxu0 0.0
    %654 = vmatpush.msra.mxu0 0.0
    %655 = vmatpush.msra.mxu0 0.0
    %656 = vmatpush.msra.mxu0 0.0
    %657 = vmatpush.msra.mxu0 0.0
    %658 = vmatpush.msra.mxu0 0.0
    %659 = vmatpush.msra.mxu0 0.0
    %660 = vmatpush.msra.mxu0 %v112
    %661 = vmatmul.f32.gmra.mxu0 %v643
    %v662 = vpop.f32.mrf.mxu0
    %v663 = vadd.f32 0.0, %v662
    %664 = vdwg.mxu0
    %666 = vset.pattern.permute.xlu0 0
    %667 = vperm.xlu0 %666, %v475
    %v668 = vpop.permute.xlu0 %667
    %v669 = vperm.slane %v668, %v330
    %v670 = vsel %vm354, %v669, 0
    %672 = vmatpush.msra.mxu0 0.0
    %673 = vmatpush.msra.mxu0 0.0
    %674 = vmatpush.msra.mxu0 0.0
    %675 = vmatpush.msra.mxu0 0.0
    %676 = vmatpush.msra.mxu0 0.0
    %677 = vmatpush.msra.mxu0 0.0
    %678 = vmatpush.msra.mxu0 0.0
    %679 = vmatpush.msra.mxu0 0.0
    %680 = vmatpush.msra.mxu0 0.0
    %681 = vmatpush.msra.mxu0 0.0
    %682 = vmatpush.msra.mxu0 0.0
    %683 = vmatpush.msra.mxu0 0.0
    %684 = vmatpush.msra.mxu0 0.0
    %685 = vmatpush.msra.mxu0 0.0
    %686 = vmatpush.msra.mxu0 0.0
    %687 = vmatpush.msra.mxu0 %v113
    %688 = vmatmul.f32.gmra.mxu0 %v670
    %v689 = vpop.f32.mrf.mxu0
    %v690 = vadd.f32 0.0, %v689
    %691 = vdwg.mxu0
    %v692 = vld [vmem:[#allocation9] sm:$0xff]
    %v693 = vld [vmem:[#allocation9 + $0x8] sm:$0xff]
    %v694 = vld [vmem:[#allocation9 + $0x10] sm:$0xff]
    %v695 = vld [vmem:[#allocation9 + $0x18] sm:$0xff]
    %v696 = vld [vmem:[%s4] sm:$0x1]
    %v698 = vperm.slane %v696, 0
    %v708 = vrot.slane %v528, 7
    %v709 = vsel %vm339, %v708, %v501
    %v710 = vrot.slane %v555, 6
    %v711 = vsel %vm341, %v710, %v709
    %v712 = vrot.slane %v582, 5
    %v713 = vsel %vm343, %v712, %v711
    %v714 = vrot.slane %v609, 4
    %v715 = vsel %vm345, %v714, %v713
    %v716 = vrot.slane %v636, 3
    %v717 = vsel %vm347, %v716, %v715
    %v718 = vrot.slane %v663, 2
    %v719 = vsel %vm349, %v718, %v717
    %v720 = vrot.slane %v690, 1
    %v721 = vsel %vm351, %v720, %v719
    %v722 = vsel %vm126, %v721, 0
    %724 = vmatpush.msra.mxu0 0.0
    %725 = vmatpush.msra.mxu0 0.0
    %726 = vmatpush.msra.mxu0 0.0
    %727 = vmatpush.msra.mxu0 0.0
    %728 = vmatpush.msra.mxu0 0.0
    %729 = vmatpush.msra.mxu0 0.0
    %730 = vmatpush.msra.mxu0 0.0
    %731 = vmatpush.msra.mxu0 0.0
    %732 = vmatpush.msra.mxu0 0.0
    %733 = vmatpush.msra.mxu0 0.0
    %734 = vmatpush.msra.mxu0 0.0
    %735 = vmatpush.msra.mxu0 0.0
    %736 = vmatpush.msra.mxu0 %v695
    %737 = vmatpush.msra.mxu0 %v694
    %738 = vmatpush.msra.mxu0 %v693
    %739 = vmatpush.msra.mxu0 %v692
    %740 = vmatmul.f32.gmra.mxu0 %v722
    %v741 = vpop.f32.mrf.mxu0
    %v742 = vadd.f32 %v698, %v741
    %743 = vdwg.mxu0
    %v744 = vmax.f32 %v742, 0.0
    %v745 = vld [vmem:[#allocation10] sm:$0xff]
    %v746 = vld [vmem:[#allocation10 + $0x8] sm:$0xff]
    %v747 = vld [vmem:[#allocation10 + $0x10] sm:$0xff]
    %v748 = vld [vmem:[#allocation10 + $0x18] sm:$0xff]
    %v749 = vld [vmem:[#allocation10 + $0x20] sm:$0xff]
    %v750 = vld [vmem:[#allocation10 + $0x28] sm:$0xff]
    %v751 = vld [vmem:[#allocation10 + $0x30] sm:$0xff]
    %v752 = vld [vmem:[#allocation10 + $0x38] sm:$0xff]
    %v753 = vld [vmem:[#allocation10 + $0x40] sm:$0xff]
    %v754 = vld [vmem:[#allocation10 + $0x48] sm:$0xff]
    %v755 = vld [vmem:[#allocation10 + $0x50] sm:$0xff]
    %v756 = vld [vmem:[#allocation10 + $0x58] sm:$0xff]
    %v757 = vld [vmem:[#allocation10 + $0x60] sm:$0xff]
    %v758 = vld [vmem:[#allocation10 + $0x68] sm:$0xff]
    %v759 = vld [vmem:[#allocation10 + $0x70] sm:$0xff]
    %v760 = vld [vmem:[#allocation10 + $0x78] sm:$0xff]
    %v761 = vld [vmem:[%s6] sm:$0x1]
    %v763 = vperm.slane %v761, 0
    %765 = vmatpush.msra.mxu0 %v760
    %766 = vmatpush.msra.mxu0 %v759
    %767 = vmatpush.msra.mxu0 %v758
    %768 = vmatpush.msra.mxu0 %v757
    %769 = vmatpush.msra.mxu0 %v756
    %770 = vmatpush.msra.mxu0 %v755
    %771 = vmatpush.msra.mxu0 %v754
    %772 = vmatpush.msra.mxu0 %v753
    %773 = vmatpush.msra.mxu0 %v752
    %774 = vmatpush.msra.mxu0 %v751
    %775 = vmatpush.msra.mxu0 %v750
    %776 = vmatpush.msra.mxu0 %v749
    %777 = vmatpush.msra.mxu0 %v748
    %778 = vmatpush.msra.mxu0 %v747
    %779 = vmatpush.msra.mxu0 %v746
    %780 = vmatpush.msra.mxu0 %v745
    %781 = vmatmul.f32.gmra.mxu0 %v744
    %v782 = vpop.f32.mrf.mxu0
    %v783 = vadd.f32 %v763, %v782
    %784 = vdwg.mxu0
    %785 = vst [vmem:[#allocation12] sm:$0xff] %v783
    %787 = vst.msk [vmem:[#allocation13] sm:$0xff] %vm126, %v721
    // Predicated region
    $region50: #{tpu_custom_call.1} parent=1 // pred_check
      _
    $region51: #{tpu_custom_call.1} parent=1 // pred_check_branch
      %789 = sbr.rel (0) target = $region53
    $region52: #{tpu_custom_call.1} parent=1 // pred_region
      %791 = vsyncadd [#allocation4], 0
      %s793 = sshll.u32 [#allocation12], 4
      %s794 = int_to_ptr.vmem [resolvable:$true] %s793
      %s795 = sshll.u32 %s7, 4
      %s796 = int_to_ptr.hbm [resolvable:$true] %s795
      %798 = dma.vmem_to_hbm [thread:$0]  %s794, 128, %s796, [#allocation4]
    $region53: #{tpu_custom_call.1} parent=1 // pred_fallthru
      _
    // Predicated region
    $region54: #{tpu_custom_call.1} parent=1 // pred_check
      _
    $region55: #{tpu_custom_call.1} parent=1 // pred_check_branch
      %800 = sbr.rel (0) target = $region57
    $region56: #{tpu_custom_call.1} parent=1 // pred_region
      %802 = vsyncadd [#allocation14], 0
      %s804 = sshll.u32 [#allocation13], 4
      %s805 = int_to_ptr.vmem [resolvable:$true] %s804
      %s806 = sshll.u32 %s8, 4
      %s807 = int_to_ptr.hbm [resolvable:$true] %s806
      %809 = dma.vmem_to_hbm [thread:$0]  %s805, 128, %s807, [#allocation14]
    $region57: #{tpu_custom_call.1} parent=1 // pred_fallthru
      _
    // Predicated region
    $region58: #{tpu_custom_call.1} parent=1 // pred_check
      _
    $region59: #{tpu_custom_call.1} parent=1 // pred_check_branch
      %811 = sbr.rel (0) target = $region61
    $region60: #{tpu_custom_call.1} parent=1 // pred_region
      %813 = dma.done [#allocation4], 128
    $region61: #{tpu_custom_call.1} parent=1 // pred_fallthru
      _
    // Predicated region
    $region62: #{tpu_custom_call.1} parent=1 // pred_check
      _
    $region63: #{tpu_custom_call.1} parent=1 // pred_check_branch
      %815 = sbr.rel (0) target = $region65
    $region64: #{tpu_custom_call.1} parent=1 // pred_region
      %817 = dma.done [#allocation14], 128
    $region65: #{tpu_custom_call.1} parent=1 // pred_fallthru
      _
    %818 = vsyncpa [#allocation3], 1
    %819 = vsyncpa [#allocation8], 1
    %820 = vsyncpa [#allocation11], 1
    %821 = vsyncpa [#allocation4], 1
    %822 = vsyncpa [#allocation14], 1
    %823 = vsyncpa [#allocation5], 1

</llo_original>
